<compile_context>
chip_gen: v5e
topology: v5e:2x2
jax: 0.10.0
libtpu: 0.0.40
codegen_flags: <defaults>
</compile_context>

<pallas_src>
import functools
import math

import jax
import jax.numpy as jnp
from jax.experimental import pallas as pl
from jax.experimental.pallas import tpu as pltpu


def _round_up(x, m):
    return ((x + m - 1) // m) * m


# ----------------------------------------------------------------------------------
# Kernel
# ----------------------------------------------------------------------------------

def lstm_cell_kernel(comb_ref, c_ref, wg_ref, wout_ref, out_ref, *, hidden, out_dim):
    """Fused single-step LSTM cell + output projection + log_softmax.

    comb_ref : (B, KP)    [x | h_prev | 1 | 0-pad]  (gate biases folded via the 1-column)
    c_ref    : (B, H)     previous cell state
    wg_ref   : (KP, 4H)   fused gate weights, gate order [f | i | o | c] along lanes,
                          row I+H holds the fused gate biases, padding rows are zero
    wout_ref : (H+1, O)   rows 0..H-1 = W_out^T, row H = b_out^T
    out_ref  : (B, P)     packed [log_probs | h_new | c_new | 0-pad], P = ceil(O+2H, 128)
    """
    H, O = hidden, out_dim

    comb = comb_ref[...]                       # (B, KP)
    c_prev = c_ref[...]                        # (B, H)

    # All four gates in ONE MXU push: (B, KP) @ (KP, 4H) -> (B, 4H)
    gates = jnp.dot(comb, wg_ref[...], preferred_element_type=jnp.float32)

    # Apply both activations across the full lane-dense gate vector, then slice
    # statically (EUP transcendentals are cheap; avoids awkward sub-vreg layouts).
    sig = jax.nn.sigmoid(gates)
    tnh = jnp.tanh(gates)
    f_gate = sig[:, 0 * H:1 * H]
    i_gate = sig[:, 1 * H:2 * H]
    o_gate = sig[:, 2 * H:3 * H]
    c_cand = tnh[:, 3 * H:4 * H]

    c_new = f_gate * c_prev + i_gate * c_cand
    h_new = o_gate * jnp.tanh(c_new)

    # Output projection: h_new (B, H) @ W_out^T (H, O) + b_out (1, O)
    w_out = wout_ref[:H, :]
    b_out = wout_ref[H:H + 1, :]
    logits = jnp.dot(h_new, w_out, preferred_element_type=jnp.float32) + b_out

    # Numerically stable log_softmax along the lane axis.
    m = jnp.max(logits, axis=1, keepdims=True)
    shifted = logits - m
    lse = jnp.log(jnp.sum(jnp.exp(shifted), axis=1, keepdims=True))
    logp = shifted - lse

    # Single lane-dense packed store: [logp | h_new | c_new | zero pad].
    b = comb.shape[0]
    pad = out_ref.shape[1] - (O + 2 * H)
    pieces = [logp, h_new, c_new]
    if pad > 0:
        pieces.append(jnp.zeros((b, pad), jnp.float32))
    out_ref[...] = jnp.concatenate(pieces, axis=1)


# ----------------------------------------------------------------------------------
# Parameter init (matches the torch module's _initialize_weights semantics) and
# one-time fusion / pre-transpose of the parameters for the kernel's hot path.
# ----------------------------------------------------------------------------------

def xavier_uniform(key, shape, dtype=jnp.float32):
    # torch.nn.init.xavier_uniform_: bound = sqrt(6 / (fan_in + fan_out))
    fan_out, fan_in = shape  # torch convention: (out_features, in_features)
    bound = math.sqrt(6.0 / (fan_in + fan_out))
    return jax.random.uniform(key, shape, dtype=dtype, minval=-bound, maxval=bound)


def init_manual_lstm_params(key, input_size, hidden_size, output_size):
    """All parameters are 2-D so all get xavier_uniform; b_f is then filled with 1."""
    ks = jax.random.split(key, 9)
    return {
        "W_f": xavier_uniform(ks[0], (hidden_size, input_size + hidden_size)),
        "W_i": xavier_uniform(ks[1], (hidden_size, input_size + hidden_size)),
        "W_o": xavier_uniform(ks[2], (hidden_size, input_size + hidden_size)),
        "W_c": xavier_uniform(ks[3], (hidden_size, input_size + hidden_size)),
        "b_f": jnp.ones((hidden_size, 1), jnp.float32),   # filled with 1 last
        "b_i": xavier_uniform(ks[4], (hidden_size, 1)),
        "b_o": xavier_uniform(ks[5], (hidden_size, 1)),
        "b_c": xavier_uniform(ks[6], (hidden_size, 1)),
        "W_out": xavier_uniform(ks[7], (output_size, hidden_size)),
        "b_out": xavier_uniform(ks[8], (output_size, 1)),
    }


def prepare_params(params):
    """One-time fusion / pre-transpose so the per-step path has zero transposes and
    only two weight slabs + two activation slabs to DMA."""
    H = params["W_f"].shape[0]
    IH = params["W_f"].shape[1]

    wg = jnp.concatenate(
        [params["W_f"], params["W_i"], params["W_o"], params["W_c"]], axis=0)   # (4H, I+H)
    bg = jnp.concatenate(
        [params["b_f"], params["b_i"], params["b_o"], params["b_c"]], axis=0)   # (4H, 1)
    wg_aug = jnp.concatenate([wg.T, bg.T], axis=0)                               # (I+H+1, 4H)

    kp = _round_up(IH + 1, 8)   # sublane-friendly K; extra zero rows are a no-op in matmul
    if kp > IH + 1:
        wg_aug = jnp.concatenate(
            [wg_aug, jnp.zeros((kp - (IH + 1), 4 * H), jnp.float32)], axis=0)

    wout_slab = jnp.concatenate([params["W_out"].T, params["b_out"].T], axis=0)  # (H+1, O)

    return {"Wg_aug": wg_aug.astype(jnp.float32),
            "Wout_slab": wout_slab.astype(jnp.float32)}


# ----------------------------------------------------------------------------------
# Forward wrapper
# ----------------------------------------------------------------------------------

def manual_lstm_forward(prepared, x, hidden):
    """x: (B, input_size); hidden: (h, c) each reshapeable to (B, hidden_size).
    Returns (log_probs (B, output_size), (h_new, c_new))."""
    h_prev, c_prev = hidden

    wg_aug = prepared["Wg_aug"]        # (KP, 4H)
    wout_slab = prepared["Wout_slab"]  # (H+1, O)
    KP = wg_aug.shape[0]
    H = wg_aug.shape[1] // 4
    O = wout_slab.shape[1]

    B, I = x.shape
    x = x.astype(jnp.float32)
    h_prev = h_prev.reshape(B, H).astype(jnp.float32)
    c_prev = c_prev.reshape(B, H).astype(jnp.float32)

    # [x | h | 1 | 0-pad]  (single concat; the 1-column folds the gate biases)
    pad = KP - (I + H + 1)
    comb_parts = [x, h_prev, jnp.ones((B, 1), jnp.float32)]
    if pad > 0:
        comb_parts.append(jnp.zeros((B, pad), jnp.float32))
    comb_aug = jnp.concatenate(comb_parts, axis=1)

    P = _round_up(O + 2 * H, 128)      # lane-dense packed output width

    vmem = pl.BlockSpec(memory_space=pltpu.MemorySpace.VMEM)
    packed = pl.pallas_call(
        functools.partial(lstm_cell_kernel, hidden=H, out_dim=O),
        out_shape=jax.ShapeDtypeStruct((B, P), jnp.float32),
        in_specs=[vmem, vmem, vmem, vmem],
        out_specs=vmem,
    )(comb_aug, c_prev, wg_aug, wout_slab)

    logp = packed[:, :O]
    h_new = packed[:, O:O + H]
    c_new = packed[:, O + H:O + 2 * H]
    return logp, (h_new, c_new)


# ----------------------------------------------------------------------------------
# Pure-JAX reference mirroring the PyTorch module exactly (for correctness check)
# ----------------------------------------------------------------------------------

def manual_lstm_reference(params, x, hidden):
    h_prev, c_prev = hidden
    combined = jnp.concatenate([x, h_prev], axis=1).T               # (I+H, 1)
    f = jax.nn.sigmoid(params["W_f"] @ combined + params["b_f"])
    i = jax.nn.sigmoid(params["W_i"] @ combined + params["b_i"])
    o = jax.nn.sigmoid(params["W_o"] @ combined + params["b_o"])
    cc = jnp.tanh(params["W_c"] @ combined + params["b_c"])
    c_new = f * c_prev.T + i * cc
    h_new = o * jnp.tanh(c_new)
    out = params["W_out"] @ h_new + params["b_out"]
    logp = jax.nn.log_softmax(out.T, axis=1)
    return logp, (h_new.T, c_new.T)


if __name__ == "__main__":
    input_size, hidden_size, output_size = 32, 32, 32

    key = jax.random.PRNGKey(0)
    k_param, k_x = jax.random.split(key)

    params = init_manual_lstm_params(k_param, input_size, hidden_size, output_size)
    prepared = prepare_params(params)

    x = jax.random.normal(k_x, (1, input_size), dtype=jnp.float32)
    h0 = jnp.zeros((1, hidden_size), jnp.float32)
    c0 = jnp.zeros((1, hidden_size), jnp.float32)

    fwd = jax.jit(manual_lstm_forward)
    logp, (h_new, c_new) = fwd(prepared, x, (h0, c0))
    jax.block_until_ready((logp, h_new, c_new))

    # Correctness vs. the un-fused reference implementation of the module.
    logp_ref, (h_ref, c_ref) = manual_lstm_reference(params, x, (h0, c0))
    assert jnp.allclose(logp, logp_ref, atol=1e-5), "log_probs mismatch vs reference"
    assert jnp.allclose(h_new, h_ref, atol=1e-5), "h_new mismatch vs reference"
    assert jnp.allclose(c_new, c_ref, atol=1e-5), "c_new mismatch vs reference"

    # Sanity: log_softmax rows sum to 1 in prob space; shapes match the module.
    assert jnp.allclose(jnp.sum(jnp.exp(logp), axis=1), 1.0, atol=1e-5)
    assert logp.shape == (1, output_size)
    assert h_new.shape == (1, hidden_size) and c_new.shape == (1, hidden_size)

    print("KERNEL_OK")
</pallas_src>

<mosaic_0001>
module attributes {stable_mosaic.version = 11 : i64} {
  func.func @lstm_cell_kernel(%arg0: memref<1x72xf32, #tpu.memory_space<vmem>>, %arg1: memref<1x32xf32, #tpu.memory_space<vmem>>, %arg2: memref<72x128xf32, #tpu.memory_space<vmem>>, %arg3: memref<33x32xf32, #tpu.memory_space<vmem>>, %arg4: memref<1x128xf32, #tpu.memory_space<vmem>>) attributes {dimension_semantics = [], scalar_prefetch = 0 : i64, scratch_operands = 0 : i64, tpu.core_type = #tpu.core_type<tc>} {
    %c0 = arith.constant 0 : index
    %c0_0 = arith.constant 0 : index
    %0 = vector.load %arg0[%c0, %c0_0] : memref<1x72xf32, #tpu.memory_space<vmem>>, vector<1x72xf32>
    %c0_1 = arith.constant 0 : index
    %c0_2 = arith.constant 0 : index
    %1 = vector.load %arg1[%c0_1, %c0_2] : memref<1x32xf32, #tpu.memory_space<vmem>>, vector<1x32xf32>
    %c0_3 = arith.constant 0 : index
    %c0_4 = arith.constant 0 : index
    %2 = vector.load %arg2[%c0_3, %c0_4] : memref<72x128xf32, #tpu.memory_space<vmem>>, vector<72x128xf32>
    %cst = arith.constant dense<0.000000e+00> : vector<1x128xf32>
    %3 = tpu.matmul %0, %2, %cst {dimension_numbers = #tpu.dot_dimension_numbers<[1], [0], [0], [1], [0, 0, 1, 1], [], []>} : vector<1x72xf32>, vector<72x128xf32>, vector<1x128xf32> -> vector<1x128xf32>
    %4 = arith.negf %3 : vector<1x128xf32>
    %5 = math.exp %4 : vector<1x128xf32>
    %cst_5 = arith.constant 1.000000e+00 : f32
    %6 = vector.broadcast %cst_5 : f32 to vector<1x128xf32>
    %7 = arith.addf %6, %5 : vector<1x128xf32>
    %8 = arith.divf %6, %7 : vector<1x128xf32>
    %9 = math.tanh %3 : vector<1x128xf32>
    %10 = vector.extract_strided_slice %8 {offsets = [0, 0], sizes = [1, 32], strides = [1, 1]} : vector<1x128xf32> to vector<1x32xf32>
    %11 = vector.extract_strided_slice %8 {offsets = [0, 32], sizes = [1, 32], strides = [1, 1]} : vector<1x128xf32> to vector<1x32xf32>
    %12 = vector.extract_strided_slice %8 {offsets = [0, 64], sizes = [1, 32], strides = [1, 1]} : vector<1x128xf32> to vector<1x32xf32>
    %13 = vector.extract_strided_slice %9 {offsets = [0, 96], sizes = [1, 32], strides = [1, 1]} : vector<1x128xf32> to vector<1x32xf32>
    %14 = arith.mulf %10, %1 : vector<1x32xf32>
    %15 = arith.mulf %11, %13 : vector<1x32xf32>
    %16 = arith.addf %14, %15 : vector<1x32xf32>
    %17 = math.tanh %16 : vector<1x32xf32>
    %18 = arith.mulf %12, %17 : vector<1x32xf32>
    %c0_6 = arith.constant 0 : index
    %c0_7 = arith.constant 0 : index
    %19 = vector.load %arg3[%c0_6, %c0_7] : memref<33x32xf32, #tpu.memory_space<vmem>>, vector<32x32xf32>
    %c32 = arith.constant 32 : index
    %c0_8 = arith.constant 0 : index
    %20 = vector.load %arg3[%c32, %c0_8] : memref<33x32xf32, #tpu.memory_space<vmem>>, vector<1x32xf32>
    %cst_9 = arith.constant dense<0.000000e+00> : vector<1x32xf32>
    %21 = tpu.matmul %18, %19, %cst_9 {dimension_numbers = #tpu.dot_dimension_numbers<[1], [0], [0], [1], [0, 0, 1, 1], [], []>} : vector<1x32xf32>, vector<32x32xf32>, vector<1x32xf32> -> vector<1x32xf32>
    %22 = arith.addf %21, %20 : vector<1x32xf32>
    %cst_10 = arith.constant dense<0xFF800000> : vector<1xf32>
    %23 = vector.multi_reduction <maximumf>, %22, %cst_10 [1] : vector<1x32xf32> to vector<1xf32>
    %24 = vector.shape_cast %23 : vector<1xf32> to vector<1x1xf32>
    %25 = vector.broadcast %24 : vector<1x1xf32> to vector<1x32xf32>
    %26 = arith.subf %22, %25 : vector<1x32xf32>
    %27 = math.exp %26 : vector<1x32xf32>
    %cst_11 = arith.constant dense<0.000000e+00> : vector<1xf32>
    %28 = vector.multi_reduction <add>, %27, %cst_11 [1] : vector<1x32xf32> to vector<1xf32>
    %29 = vector.shape_cast %28 : vector<1xf32> to vector<1x1xf32>
    %30 = math.log %29 : vector<1x1xf32>
    %31 = vector.broadcast %30 : vector<1x1xf32> to vector<1x32xf32>
    %32 = arith.subf %26, %31 : vector<1x32xf32>
    %cst_12 = arith.constant 0.000000e+00 : f32
    %33 = vector.broadcast %cst_12 : f32 to vector<1x32xf32>
    %34 = tpu.concatenate %32, %18, %16, %33 in 1 : vector<1x32xf32>, vector<1x32xf32>, vector<1x32xf32>, vector<1x32xf32> -> vector<1x128xf32>
    %c0_13 = arith.constant 0 : index
    %c0_14 = arith.constant 0 : index
    %35 = vector.load %arg4[%c0_13, %c0_14] : memref<1x128xf32, #tpu.memory_space<vmem>>, vector<1x128xf32>
    tpu.vector_store %arg4[%c0_13, %c0_14], %34 {strides = array<i32>} : memref<1x128xf32, #tpu.memory_space<vmem>>, vector<1x128xf32>,
    return
  }
}

</mosaic_0001>

<llo_original>
// kernel: manual_lstm_forward.1
$region0: #{manual_lstm_forward.1}
  #allocation0 [shape = 'u32[]', space=smem, size = 0x4, offset = 0x4, fixed_abs, tag = 'smem constant byte address 0x4 - core index']
  #allocation1 [shape = 'u32[72,128]{1,0:T(1,128)}', space=vmem, size = 0x9000, scoped, tag = 'internal scratch']
  %s0 = inlined_call_operand.vmem [shape: f32[1,72], index: 0, kind: input, shape index: {}]
  %s1 = inlined_call_operand.vmem [shape: f32[1,32], index: 1, kind: input, shape index: {}]
  %s2 = inlined_call_operand.vmem [shape: f32[72,128], index: 2, kind: input, shape index: {}]
  %s3 = inlined_call_operand.vmem [shape: f32[33,32], index: 3, kind: input, shape index: {}]
  %s4 = inlined_call_operand.vmem [shape: f32[1,128], index: 4, kind: output, shape index: {}]
  %s5 = sld [smem:[#allocation0]]
  $region26: #{manual_lstm_forward.1} parent=0
    _
  %s7 = ssub.s32 1, %s5
  %s8 = scalar_select 0, %s7, %s5
  // Predicated region
  $region2: #{manual_lstm_forward.1} parent=0 // pred_check
    _
  $region3: #{manual_lstm_forward.1} parent=0 // pred_check_branch
    %10 = sbr.rel (0) target = $region5
  $region4: #{manual_lstm_forward.1} parent=0 // pred_region
    _
  $region5: #{manual_lstm_forward.1} parent=0 // pred_fallthru
    _
  // Predicated region
  $region6: #{manual_lstm_forward.1} parent=0 // pred_check
    _
  $region7: #{manual_lstm_forward.1} parent=0 // pred_check_branch
    %12 = sbr.rel (0) target = $region9
  $region8: #{manual_lstm_forward.1} parent=0 // pred_region
    _
  $region9: #{manual_lstm_forward.1} parent=0 // pred_fallthru
    _
  // Predicated region
  $region10: #{manual_lstm_forward.1} parent=0 // pred_check
    _
  $region11: #{manual_lstm_forward.1} parent=0 // pred_check_branch
    %14 = sbr.rel (0) target = $region13
  $region12: #{manual_lstm_forward.1} parent=0 // pred_region
    _
  $region13: #{manual_lstm_forward.1} parent=0 // pred_fallthru
    _
  // Predicated region
  $region14: #{manual_lstm_forward.1} parent=0 // pred_check
    _
  $region15: #{manual_lstm_forward.1} parent=0 // pred_check_branch
    %16 = sbr.rel (0) target = $region17
  $region16: #{manual_lstm_forward.1} parent=0 // pred_region
    _
  $region17: #{manual_lstm_forward.1} parent=0 // pred_fallthru
    _
  %v17 = vld [vmem:[%s0] sm:$0x1]
  %v18 = vld [vmem:[%s1] sm:$0x1]
  %v19 = vld [vmem:[%s2] sm:$0xff]
  %v20 = vld [vmem:[%s2 + $0x8] sm:$0xff]
  %v21 = vld [vmem:[%s2 + $0x10] sm:$0xff]
  %v22 = vld [vmem:[%s2 + $0x18] sm:$0xff]
  %v23 = vld [vmem:[%s2 + $0x20] sm:$0xff]
  %v24 = vld [vmem:[%s2 + $0x28] sm:$0xff]
  %v25 = vld [vmem:[%s2 + $0x30] sm:$0xff]
  %v26 = vld [vmem:[%s2 + $0x38] sm:$0xff]
  %v27 = vld [vmem:[%s2 + $0x40] sm:$0xff]
  %vm28 = vcmask 588800
  %v30 = vsel %vm28, %v17, 0
  %32 = vmatpush.msra.mxu0 0.0
  %33 = vmatpush.msra.mxu0 0.0
  %34 = vmatpush.msra.mxu0 0.0
  %35 = vmatpush.msra.mxu0 0.0
  %36 = vmatpush.msra.mxu0 0.0
  %37 = vmatpush.msra.mxu0 0.0
  %38 = vmatpush.msra.mxu0 0.0
  %39 = vmatpush.msra.mxu0 %v27
  %40 = vmatpush.msra.mxu0 %v26
  %41 = vmatpush.msra.mxu0 %v25
  %42 = vmatpush.msra.mxu0 %v24
  %43 = vmatpush.msra.mxu0 %v23
  %44 = vmatpush.msra.mxu0 %v22
  %45 = vmatpush.msra.mxu0 %v21
  %46 = vmatpush.msra.mxu0 %v20
  %47 = vmatpush.msra.mxu0 %v19
  %48 = vmatmul.f32.gmra.mxu0 %v30
  %v49 = vpop.f32.mrf.mxu0
  %v50 = vadd.f32 0.0, %v49
  %51 = vdwg.mxu0
  %v52 = vxor.u32 %v50, 2147483648
  %v53 = vmul.f32 %v52, 1.442695
  %v54 = vpow.pop %v53
  %v55 = vadd.f32 %v54, 1.0
  %v56 = vrcp.pop %v55
  %v57 = vmul.f32 %v55, %v56
  %v58 = vsub.f32 1.0, %v57
  %v59 = vmul.f32 %v56, %v58
  %v60 = vadd.f32 %v56, %v59
  %vm61 = vweird.f32 %v55
  %vm62 = vweird.f32 %v56
  %vm63 = vmor %vm61, %vm62
  %v64 = vsel %vm63, %v56, %v60
  %v65 = vand.u32 2147483647, %v55
  %vm66 = vcmp.eq.f32.partialorder %v65, 8.507059e+37
  %v67 = vand.u32 %v55, 2147483648
  %v68 = vor.u32 1.1754944e-38, %v67
  %v69 = vsel %vm66, %v68, %v64
  %v70 = vmul.f32 1.0, %v69
  %v71 = vtanh.pop %v50
  %v72 = vmul.f32 %v70, %v18
  %74 = vrot.lane.b32.xlu0 %v71, 64
  %v75 = vpop.permute.xlu0 %74
  %v77 = vmul.f32 %v70, %v75
  %79 = vrot.lane.b32.xlu0 %v77, 96
  %v80 = vpop.permute.xlu0 %79
  %v82 = vadd.f32 %v72, %v80
  %v83 = vtanh.pop %v82
  %85 = vrot.lane.b32.xlu0 %v83, 64
  %v86 = vpop.permute.xlu0 %85
  %v88 = vmul.f32 %v70, %v86
  %v89 = vld [vmem:[%s3] sm:$0xff]
  %v90 = vld [vmem:[%s3 + $0x8] sm:$0xff]
  %v91 = vld [vmem:[%s3 + $0x10] sm:$0xff]
  %v92 = vld [vmem:[%s3 + $0x18] sm:$0xff]
  %v93 = vld [vmem:[%s3 + $0x20] sm:$0x1]
  %95 = vrot.lane.b32.xlu0 %v88, 64
  %v96 = vpop.permute.xlu0 %95
  %vm97 = vcmask 261120
  %v98 = vsel %vm97, %v96, 0
  %100 = vmatpush.msra.mxu0 0.0
  %101 = vmatpush.msra.mxu0 0.0
  %102 = vmatpush.msra.mxu0 0.0
  %103 = vmatpush.msra.mxu0 0.0
  %104 = vmatpush.msra.mxu0 0.0
  %105 = vmatpush.msra.mxu0 0.0
  %106 = vmatpush.msra.mxu0 0.0
  %107 = vmatpush.msra.mxu0 0.0
  %108 = vmatpush.msra.mxu0 0.0
  %109 = vmatpush.msra.mxu0 0.0
  %110 = vmatpush.msra.mxu0 0.0
  %111 = vmatpush.msra.mxu0 0.0
  %112 = vmatpush.msra.mxu0 %v92
  %113 = vmatpush.msra.mxu0 %v91
  %114 = vmatpush.msra.mxu0 %v90
  %115 = vmatpush.msra.mxu0 %v89
  %116 = vmatmul.f32.gmra.mxu0 %v98
  %v117 = vpop.f32.mrf.mxu0
  %v118 = vadd.f32 %v93, %v117
  %119 = vdwg.mxu0
  %vm120 = vcmask 253952
  %v121 = vsel %vm120, %v118, -inf
  %122 = vmax.xlane.f32.xlu0 %v121
  %v123 = vpop.xlane.xlu0 %122
  %v124 = vsub.f32 %v118, %v123
  %v125 = vmul.f32 %v124, 1.442695
  %v126 = vpow.pop %v125
  %v127 = vsel %vm120, %v126, 0.0
  %128 = vadd.xlane.f32.xlu0 %v127
  %v129 = vpop.xlane.xlu0 %128
  %v130 = vlog2.pop %v129
  %v131 = vmul.f32 %v130, 0.6931472
  %v132 = vsub.f32 %v124, %v131
  %133 = vrot.lane.b32.xlu0 %v88, 96
  %v134 = vpop.permute.xlu0 %133
  %137 = vrot.lane.b32.xlu0 %v82, 64
  %v138 = vpop.permute.xlu0 %137
  %v140 = vsel %vm97, %v132, %v134
  %vm141 = vcmask 523264
  %v142 = vsel %vm141, %v140, %v138
  %vm143 = vcmask 785408
  %v144 = vsel %vm143, %v142, 0.0
  %145 = vst [vmem:[%s4] sm:$0x1] %v144
  // Predicated region
  $region18: #{manual_lstm_forward.1} parent=0 // pred_check
    _
  $region19: #{manual_lstm_forward.1} parent=0 // pred_check_branch
    %147 = sbr.rel (0) target = $region21
  $region20: #{manual_lstm_forward.1} parent=0 // pred_region
    _
  $region21: #{manual_lstm_forward.1} parent=0 // pred_fallthru
    _
  // Predicated region
  $region22: #{manual_lstm_forward.1} parent=0 // pred_check
    _
  $region23: #{manual_lstm_forward.1} parent=0 // pred_check_branch
    %149 = sbr.rel (0) target = $region25
  $region24: #{manual_lstm_forward.1} parent=0 // pred_region
    _
  $region25: #{manual_lstm_forward.1} parent=0 // pred_fallthru
    _

</llo_original>
